<compile_context>
chip_gen: v6e
topology: v6e:2x2x1
jax: 0.10.0
libtpu: 0.0.40
codegen_flags: <defaults>
</compile_context>

<pallas_src>
import functools

import numpy as np
import jax
import jax.numpy as jnp
from jax import lax
from jax.experimental import pallas as pl
from jax.experimental.pallas import tpu as pltpu

# ----- config flags mirrored from cfg.* that the module reads -----
USE_OVLP_FILTER = True      # cfg.MODEL.USE_OVLP_FILTER
USE_SPATIAL_FEAT = True     # cfg.MODEL.USE_SPATIAL_FEAT
USE_FREQ_BIAS = True        # cfg.MODEL.USE_FREQ_BIAS
FPN_ON = False              # cfg.FPN.FPN_ON (multilevel roi blobs skipped)

_SUB = 8        # sublanes per vreg
_LANES = 128    # lanes per vreg
_ST_MAX = 128   # sublane-rows per grid step -> up to 128*128 = 16384 pairs/step


# ----------------------------------------------------------------------------
# Pallas kernel: per-pair box math for one tile of (ST x 128) pairs.
# Layout: pair index p = sublane*128 + lane; channels on the leading axis.
# ----------------------------------------------------------------------------
def _relpn_pair_kernel(im_ref, sbj_ref, obj_ref, inter_ref, rel_ref, spt_ref):
    # im_ref: SMEM (4,) f32 = [1/im_scale, 1/im_w, 1/im_h, 1/(im_w*im_h)]
    # Hoisted scalar -> vreg broadcasts, loop-invariant across all chunks.
    inv_scale = jnp.full((_SUB, _LANES), im_ref[0], dtype=jnp.float32)
    inv_w = jnp.full((_SUB, _LANES), im_ref[1], dtype=jnp.float32)
    inv_h = jnp.full((_SUB, _LANES), im_ref[2], dtype=jnp.float32)
    inv_wh = jnp.full((_SUB, _LANES), im_ref[3], dtype=jnp.float32)

    nchunks = sbj_ref.shape[1] // _SUB   # static python int

    def chunk(c, carry):
        s0 = pl.multiple_of(c * _SUB, _SUB)
        sl = pl.ds(s0, _SUB)

        # raw rois (scaled-image coordinates); each slice is a dense (8,128)
        sb = sbj_ref[0, sl, :]
        s_x1 = sbj_ref[1, sl, :]
        s_y1 = sbj_ref[2, sl, :]
        s_x2 = sbj_ref[3, sl, :]
        s_y2 = sbj_ref[4, sl, :]
        o_x1 = obj_ref[0, sl, :]
        o_y1 = obj_ref[1, sl, :]
        o_x2 = obj_ref[2, sl, :]
        o_y2 = obj_ref[3, sl, :]

        # --- rel_rois = rois_union(sbj_rois, obj_rois) (scaled coords) ---
        rel_ref[0, sl, :] = sb
        rel_ref[1, sl, :] = jnp.minimum(s_x1, o_x1)
        rel_ref[2, sl, :] = jnp.minimum(s_y1, o_y1)
        rel_ref[3, sl, :] = jnp.maximum(s_x2, o_x2)
        rel_ref[4, sl, :] = jnp.maximum(s_y2, o_y2)

        # --- boxes in original-image coordinates (reciprocal multiply) ---
        sx1 = s_x1 * inv_scale; sy1 = s_y1 * inv_scale
        sx2 = s_x2 * inv_scale; sy2 = s_y2 * inv_scale
        ox1 = o_x1 * inv_scale; oy1 = o_y1 * inv_scale
        ox2 = o_x2 * inv_scale; oy2 = o_y2 * inv_scale

        # widths / heights / areas (+1 pixel convention)
        sw = sx2 - sx1 + 1.0; sh = sy2 - sy1 + 1.0
        ow = ox2 - ox1 + 1.0; oh = oy2 - oy1 + 1.0
        area_s = sw * sh
        area_o = ow * oh

        # --- pairwise intersection area.  The host filters on inter > 0; the
        #     IoU denominator (area_s + area_o - inter) is strictly positive,
        #     so the decision is identical to filtering IoU > 0 and we avoid
        #     the full-vreg divide per chunk. ---
        iw = jnp.maximum(jnp.minimum(sx2, ox2) - jnp.maximum(sx1, ox1) + 1.0, 0.0)
        ih = jnp.maximum(jnp.minimum(sy2, oy2) - jnp.maximum(sy1, oy1) + 1.0, 0.0)
        inter_ref[0, sl, :] = iw * ih

        # union box
        ux1 = jnp.minimum(sx1, ox1); uy1 = jnp.minimum(sy1, oy1)
        ux2 = jnp.maximum(sx2, ox2); uy2 = jnp.maximum(sy2, oy2)
        uw = ux2 - ux1 + 1.0; uh = uy2 - uy1 + 1.0

        # shared per-box reciprocals (EUP) / logs / centers, reused across all
        # three pair_feature blocks
        inv_sw = pl.reciprocal(sw); inv_sh = pl.reciprocal(sh)
        inv_ow = pl.reciprocal(ow); inv_oh = pl.reciprocal(oh)
        inv_uw = pl.reciprocal(uw); inv_uh = pl.reciprocal(uh)
        log_sw = jnp.log(sw); log_sh = jnp.log(sh)
        log_ow = jnp.log(ow); log_oh = jnp.log(oh)
        log_uw = jnp.log(uw); log_uh = jnp.log(uh)
        scx = sx1 + 0.5 * sw; scy = sy1 + 0.5 * sh
        ocx = ox1 + 0.5 * ow; ocy = oy1 + 0.5 * oh
        ucx = ux1 + 0.5 * uw; ucy = uy1 + 0.5 * uh

        # --- 28-channel spatial features (box_utils_rel.get_spt_features) ---
        # pair_feature(sbj, obj)
        spt_ref[0, sl, :] = (ocx - scx) * inv_sw
        spt_ref[1, sl, :] = (ocy - scy) * inv_sh
        spt_ref[2, sl, :] = log_ow - log_sw
        spt_ref[3, sl, :] = log_oh - log_sh
        spt_ref[4, sl, :] = (scx - ocx) * inv_ow
        spt_ref[5, sl, :] = (scy - ocy) * inv_oh
        # pair_feature(sbj, union)
        spt_ref[6, sl, :] = (ucx - scx) * inv_sw
        spt_ref[7, sl, :] = (ucy - scy) * inv_sh
        spt_ref[8, sl, :] = log_uw - log_sw
        spt_ref[9, sl, :] = log_uh - log_sh
        spt_ref[10, sl, :] = (scx - ucx) * inv_uw
        spt_ref[11, sl, :] = (scy - ucy) * inv_uh
        # pair_feature(union, obj)
        spt_ref[12, sl, :] = (ocx - ucx) * inv_uw
        spt_ref[13, sl, :] = (ocy - ucy) * inv_uh
        spt_ref[14, sl, :] = log_ow - log_uw
        spt_ref[15, sl, :] = log_oh - log_uh
        spt_ref[16, sl, :] = (ucx - ocx) * inv_ow
        spt_ref[17, sl, :] = (ucy - ocy) * inv_oh
        # box_feature(sbj)
        spt_ref[18, sl, :] = sx1 * inv_w
        spt_ref[19, sl, :] = sy1 * inv_h
        spt_ref[20, sl, :] = sx2 * inv_w
        spt_ref[21, sl, :] = sy2 * inv_h
        spt_ref[22, sl, :] = area_s * inv_wh
        # box_feature(obj)
        spt_ref[23, sl, :] = ox1 * inv_w
        spt_ref[24, sl, :] = oy1 * inv_h
        spt_ref[25, sl, :] = ox2 * inv_w
        spt_ref[26, sl, :] = oy2 * inv_h
        spt_ref[27, sl, :] = area_o * inv_wh
        return carry

    # strip-mine the block over (8,128) chunks; partial unroll bounds vreg
    # pressure while keeping LLO scheduling visibility
    lax.fori_loop(0, nchunks, chunk, 0, unroll=min(4, nchunks))


# ----------------------------------------------------------------------------
# Tiling choice (host, Python ints only)
# ----------------------------------------------------------------------------
def _round_up(x, m):
    return ((x + m - 1) // m) * m


def _tiling(p):
    """Returns (sublane-rows per step, padded sublane-rows, padded pairs)."""
    s = _round_up(max((p + _LANES - 1) // _LANES, 1), _SUB)
    if s <= _SUB:
        return s, s, s * _LANES                     # single small step
    # keep grid length >= 2 so the "parallel" axis shards across TCs (v7x),
    # while allowing steps of up to _ST_MAX sublane-rows
    st = min(_ST_MAX, _round_up((s + 1) // 2, _SUB))
    s_pad = _round_up(s, st)
    return st, s_pad, s_pad * _LANES


# ----------------------------------------------------------------------------
# Jitted device wrapper: pallas_call only; inputs/outputs stay channel-major
# ----------------------------------------------------------------------------
@functools.partial(jax.jit, static_argnames=("st",))
def _relpn_pairs_device(sbj_cm, obj_cm, im_vec, *, st):
    # sbj_cm: (5, s_pad, 128) f32   obj_cm: (4, s_pad, 128) f32
    # im_vec: (4,) f32 = [1/im_scale, 1/im_w, 1/im_h, 1/(im_w*im_h)]
    _, s_pad, lanes = sbj_cm.shape
    p_pad = s_pad * lanes
    grid = (s_pad // st,)

    out_shape = (
        jax.ShapeDtypeStruct((1, s_pad, lanes), jnp.float32),   # intersection
        jax.ShapeDtypeStruct((5, s_pad, lanes), jnp.float32),   # rel_rois
        jax.ShapeDtypeStruct((28, s_pad, lanes), jnp.float32),  # spt_feat
    )
    inter_t, rel_t, spt_t = pl.pallas_call(
        _relpn_pair_kernel,
        out_shape=out_shape,
        grid=grid,
        in_specs=[
            pl.BlockSpec(memory_space=pltpu.MemorySpace.SMEM),    # im_vec (4,)
            pl.BlockSpec((5, st, lanes), lambda i: (0, i, 0)),    # sbj rois
            pl.BlockSpec((4, st, lanes), lambda i: (0, i, 0)),    # obj rois
        ],
        out_specs=(
            pl.BlockSpec((1, st, lanes), lambda i: (0, i, 0)),
            pl.BlockSpec((5, st, lanes), lambda i: (0, i, 0)),
            pl.BlockSpec((28, st, lanes), lambda i: (0, i, 0)),
        ),
        compiler_params=pltpu.CompilerParams(
            dimension_semantics=("parallel",)),   # shards across TCs on v7x
    )(im_vec, sbj_cm, obj_cm)

    # Channel-major outputs: cheap dim-merge reshapes only, no device transpose.
    return (inter_t.reshape(p_pad),
            rel_t.reshape(5, p_pad),
            spt_t.reshape(28, p_pad))


# ----------------------------------------------------------------------------
# Host-side glue replicating the module's index logic (pure numpy, as original)
# ----------------------------------------------------------------------------
def _remove_self_pairs(det_size, sbj_inds, obj_inds):
    mask = np.ones(sbj_inds.shape[0], dtype=bool)
    for i in range(det_size):
        mask[i + det_size * i] = False
    keeps = np.where(mask)[0]
    return sbj_inds[keeps], obj_inds[keeps]


def _sbj_adapt_remove_self_pairs(det_size, sbj_inds, obj_inds, person_inds):
    mask = np.ones(sbj_inds.shape[0], dtype=bool)
    for i in range(person_inds.shape[0]):
        mask[person_inds[i] + det_size * i] = False
    keeps = np.where(mask)[0]
    return sbj_inds[keeps], obj_inds[keeps]


def relpn_forward(det_rois, det_labels, det_scores, im_info, dataset_name,
                  lim_score=1.0):
    """Inference forward pass of single_scale_relpn_outputs."""
    # TODO(synk): training branch (RelPN_GenerateProposalLabels sampling) not implemented.
    n = det_rois.shape[0]
    person_inds = np.where(det_labels <= 1)[0]
    if dataset_name.find('ag') >= 0 and len(person_inds) > 0:
        sbj_inds = np.repeat(person_inds, n)
        obj_inds = np.tile(np.arange(n), person_inds.shape[0])
        if n > 1:
            sbj_inds, obj_inds = _sbj_adapt_remove_self_pairs(
                n, sbj_inds, obj_inds, person_inds)
    else:
        sbj_inds = np.repeat(np.arange(n), n)
        obj_inds = np.tile(np.arange(n), n)
        if n > 1:
            sbj_inds, obj_inds = _remove_self_pairs(n, sbj_inds, obj_inds)

    sbj_rois = det_rois[sbj_inds].astype(np.float32, copy=False)
    obj_rois = det_rois[obj_inds].astype(np.float32, copy=False)
    im_h = float(im_info[:, 0][0])
    im_w = float(im_info[:, 1][0])
    im_scale = float(im_info[:, 2][0])

    # --- channel-major, tile-padded inputs built directly on the host ---
    p = sbj_rois.shape[0]
    st, s_pad, p_pad = _tiling(p)
    pad_roi = np.array([0.0, 0.0, 0.0, 15.0, 15.0], dtype=np.float32)

    sbj_cm = np.empty((5, s_pad, _LANES), dtype=np.float32)
    obj_cm = np.empty((4, s_pad, _LANES), dtype=np.float32)
    sflat = sbj_cm.reshape(5, p_pad)
    oflat = obj_cm.reshape(4, p_pad)
    sflat[:, :p] = sbj_rois.T
    oflat[:, :p] = obj_rois[:, 1:].T          # obj batch-index column unused
    if p_pad > p:
        sflat[:, p:] = pad_roi[:, None]
        oflat[:, p:] = pad_roi[1:, None]

    im_vec = np.array(
        [1.0 / im_scale, 1.0 / im_w, 1.0 / im_h, 1.0 / (im_w * im_h)],
        dtype=np.float32)

    inter_d, rel_d, spt_d = _relpn_pairs_device(
        jnp.asarray(sbj_cm), jnp.asarray(obj_cm), jnp.asarray(im_vec), st=st)

    inter = np.asarray(inter_d)[:p]           # np.asarray blocks on the result
    rel_rois = np.asarray(rel_d)[:, :p].T     # (p, 5)  host-side view transpose
    spt_feat = np.asarray(spt_d)[:, :p].T     # (p, 28) host-side view transpose

    # --- overlap filter (dynamic shape -> host, like original numpy code).
    #     inter > 0 is decision-identical to IoU > 0 (positive denominator). ---
    if USE_OVLP_FILTER and lim_score >= 0.015:
        ovlp_inds = np.where(inter > 0)[0]
        if ovlp_inds.size > 0:
            sbj_inds = sbj_inds[ovlp_inds]
            obj_inds = obj_inds[ovlp_inds]
            sbj_rois = sbj_rois[ovlp_inds]
            obj_rois = obj_rois[ovlp_inds]
            rel_rois = rel_rois[ovlp_inds]
            spt_feat = spt_feat[ovlp_inds]

    sbj_labels = det_labels[sbj_inds]
    obj_labels = det_labels[obj_inds]
    sbj_scores = det_scores[sbj_inds]
    obj_scores = det_scores[obj_inds]

    return_dict = {
        'det_rois': det_rois, 'det_labels': det_labels,
        'sbj_inds': sbj_inds, 'obj_inds': obj_inds,
        'sbj_rois': sbj_rois, 'obj_rois': obj_rois, 'rel_rois': rel_rois,
        'sbj_labels': sbj_labels, 'obj_labels': obj_labels,
        'sbj_scores': sbj_scores, 'obj_scores': obj_scores,
        'fg_size': np.array([sbj_rois.shape[0]], dtype=np.int32),
    }
    if USE_SPATIAL_FEAT:
        return_dict['spt_feat'] = spt_feat
    if USE_FREQ_BIAS:
        return_dict['all_sbj_labels_int32'] = sbj_labels.astype(np.int32) - 1
        return_dict['all_obj_labels_int32'] = obj_labels.astype(np.int32) - 1
    # TODO(synk): FPN multilevel-roi blob remapping (cfg.FPN.FPN_ON) not implemented.
    return return_dict


# ----------------------------------------------------------------------------
# Pure-numpy reference (mirrors box_utils_rel) for verification
# ----------------------------------------------------------------------------
def _np_pair_overlaps(b1, b2):
    ix1 = np.maximum(b1[:, 0], b2[:, 0]); iy1 = np.maximum(b1[:, 1], b2[:, 1])
    ix2 = np.minimum(b1[:, 2], b2[:, 2]); iy2 = np.minimum(b1[:, 3], b2[:, 3])
    iw = np.maximum(ix2 - ix1 + 1.0, 0.0); ih = np.maximum(iy2 - iy1 + 1.0, 0.0)
    inter = iw * ih
    a1 = (b1[:, 2] - b1[:, 0] + 1.0) * (b1[:, 3] - b1[:, 1] + 1.0)
    a2 = (b2[:, 2] - b2[:, 0] + 1.0) * (b2[:, 3] - b2[:, 1] + 1.0)
    return inter / (a1 + a2 - inter)


def _np_transform_inv(a, b):
    ew = a[:, 2] - a[:, 0] + 1.0; eh = a[:, 3] - a[:, 1] + 1.0
    ecx = a[:, 0] + 0.5 * ew; ecy = a[:, 1] + 0.5 * eh
    gw = b[:, 2] - b[:, 0] + 1.0; gh = b[:, 3] - b[:, 1] + 1.0
    gcx = b[:, 0] + 0.5 * gw; gcy = b[:, 1] + 0.5 * gh
    return np.vstack(((gcx - ecx) / ew, (gcy - ecy) / eh,
                      np.log(gw / ew), np.log(gh / eh))).T


def _np_spt_features(b1, b2, w, h):
    bu = np.vstack((np.minimum(b1[:, 0], b2[:, 0]), np.minimum(b1[:, 1], b2[:, 1]),
                    np.maximum(b1[:, 2], b2[:, 2]), np.maximum(b1[:, 3], b2[:, 3]))).T

    def pair(a, b):
        return np.hstack((_np_transform_inv(a, b), _np_transform_inv(b, a)[:, :2]))

    def boxf(b):
        return np.vstack((b[:, 0] / w, b[:, 1] / h, b[:, 2] / w, b[:, 3] / h,
                          (b[:, 2] - b[:, 0] + 1.0) * (b[:, 3] - b[:, 1] + 1.0) / (w * h))).T

    return np.hstack((pair(b1, b2), pair(b1, bu), pair(bu, b2), boxf(b1), boxf(b2)))


def _run_check(n_det, seed):
    key = jax.random.PRNGKey(seed)
    im_h_s, im_w_s, im_scale = 600.0 * 1.5, 800.0 * 1.5, 1.5

    k1, k2, k3, k4, k5, k6 = jax.random.split(key, 6)
    x1 = np.asarray(jax.random.uniform(k1, (n_det,), minval=0.0, maxval=0.5 * im_w_s))
    y1 = np.asarray(jax.random.uniform(k2, (n_det,), minval=0.0, maxval=0.5 * im_h_s))
    bw = np.asarray(jax.random.uniform(k3, (n_det,), minval=16.0, maxval=0.45 * im_w_s))
    bh = np.asarray(jax.random.uniform(k4, (n_det,), minval=16.0, maxval=0.45 * im_h_s))
    det_rois = np.stack([np.zeros(n_det), x1, y1, x1 + bw, y1 + bh], axis=1).astype(np.float32)
    det_labels = np.asarray(jax.random.randint(k5, (n_det,), 0, 10))
    det_scores = np.asarray(jax.random.uniform(k6, (n_det,)), dtype=np.float32)
    im_info = np.array([[im_h_s, im_w_s, im_scale]], dtype=np.float32)

    out = relpn_forward(det_rois, det_labels, det_scores, im_info, dataset_name="vg")

    # ---- numpy reference for the kernel-computed quantities ----
    sbj_inds = np.repeat(np.arange(n_det), n_det)
    obj_inds = np.tile(np.arange(n_det), n_det)
    sbj_inds, obj_inds = _remove_self_pairs(n_det, sbj_inds, obj_inds)
    sbj_rois_r = det_rois[sbj_inds]
    obj_rois_r = det_rois[obj_inds]
    sbj_boxes = (sbj_rois_r[:, 1:] / np.float32(im_scale)).astype(np.float32)
    obj_boxes = (obj_rois_r[:, 1:] / np.float32(im_scale)).astype(np.float32)
    ovlp_r = _np_pair_overlaps(sbj_boxes, obj_boxes)
    keep = np.where(ovlp_r > 0)[0]
    if keep.size > 0:
        sbj_inds, obj_inds = sbj_inds[keep], obj_inds[keep]
        sbj_rois_r, obj_rois_r = sbj_rois_r[keep], obj_rois_r[keep]
        sbj_boxes, obj_boxes = sbj_boxes[keep], obj_boxes[keep]
    rel_rois_r = np.vstack((sbj_rois_r[:, 0],
                            np.minimum(sbj_rois_r[:, 1], obj_rois_r[:, 1]),
                            np.minimum(sbj_rois_r[:, 2], obj_rois_r[:, 2]),
                            np.maximum(sbj_rois_r[:, 3], obj_rois_r[:, 3]),
                            np.maximum(sbj_rois_r[:, 4], obj_rois_r[:, 4]))).T
    spt_r = _np_spt_features(sbj_boxes, obj_boxes, im_w_s, im_h_s)

    assert np.array_equal(out['sbj_inds'], sbj_inds)
    assert np.array_equal(out['obj_inds'], obj_inds)
    assert int(out['fg_size'][0]) == sbj_rois_r.shape[0]
    np.testing.assert_allclose(out['rel_rois'], rel_rois_r, rtol=1e-4, atol=1e-4)
    np.testing.assert_allclose(out['spt_feat'], spt_r, rtol=1e-3, atol=1e-3)
    return out


if __name__ == "__main__":
    # small case (single grid step) + larger case (multi-step grid, chunk loop)
    out = None
    for n_det, seed in ((16, 0), (60, 1)):
        out = _run_check(n_det, seed)
    jax.block_until_ready(jnp.asarray(out['spt_feat']))
    print("KERNEL_OK")
</pallas_src>

<mosaic_0001>
module attributes {stable_mosaic.version = 11 : i64} {
  func.func @_relpn_pair_kernel(%arg0: i32, %arg1: memref<4xf32, #tpu.memory_space<smem>>, %arg2: memref<5x8x128xf32, #tpu.memory_space<vmem>>, %arg3: memref<4x8x128xf32, #tpu.memory_space<vmem>>, %arg4: memref<1x8x128xf32, #tpu.memory_space<vmem>>, %arg5: memref<5x8x128xf32, #tpu.memory_space<vmem>>, %arg6: memref<28x8x128xf32, #tpu.memory_space<vmem>>) attributes {dimension_semantics = [#tpu.dimension_semantics<parallel>], iteration_bounds = array<i64: 1>, scalar_prefetch = 0 : i64, scratch_operands = 0 : i64, tpu.core_type = #tpu.core_type<tc>, window_params = [{transform_indices = @transform_0, window_bounds = array<i64: 4>}, {transform_indices = @transform_1, window_bounds = array<i64: 5, 8, 128>}, {transform_indices = @transform_2, window_bounds = array<i64: 4, 8, 128>}, {transform_indices = @transform_3, window_bounds = array<i64: 1, 8, 128>}, {transform_indices = @transform_4, window_bounds = array<i64: 5, 8, 128>}, {transform_indices = @transform_5, window_bounds = array<i64: 28, 8, 128>}]} {
    %c0 = arith.constant 0 : index
    %0 = memref.load %arg1[%c0] : memref<4xf32, #tpu.memory_space<smem>>
    %1 = vector.broadcast %0 : f32 to vector<8x128xf32>
    %c1 = arith.constant 1 : index
    %2 = memref.load %arg1[%c1] : memref<4xf32, #tpu.memory_space<smem>>
    %3 = vector.broadcast %2 : f32 to vector<8x128xf32>
    %c2 = arith.constant 2 : index
    %4 = memref.load %arg1[%c2] : memref<4xf32, #tpu.memory_space<smem>>
    %5 = vector.broadcast %4 : f32 to vector<8x128xf32>
    %c3 = arith.constant 3 : index
    %6 = memref.load %arg1[%c3] : memref<4xf32, #tpu.memory_space<smem>>
    %7 = vector.broadcast %6 : f32 to vector<8x128xf32>
    %c0_i32 = arith.constant 0 : i32
    %c8_i32 = arith.constant 8 : i32
    %8 = arith.muli %c0_i32, %c8_i32 : i32
    %9 = tpu.assume_multiple %8, 8 : i32
    %c0_0 = arith.constant 0 : index
    %10 = arith.index_cast %9 : i32 to index
    %c0_1 = arith.constant 0 : index
    %11 = vector.load %arg2[%c0_0, %10, %c0_1] : memref<5x8x128xf32, #tpu.memory_space<vmem>>, vector<1x8x128xf32>
    %12 = vector.shape_cast %11 : vector<1x8x128xf32> to vector<8x128xf32>
    %c1_2 = arith.constant 1 : index
    %13 = arith.index_cast %9 : i32 to index
    %c0_3 = arith.constant 0 : index
    %14 = vector.load %arg2[%c1_2, %13, %c0_3] : memref<5x8x128xf32, #tpu.memory_space<vmem>>, vector<1x8x128xf32>
    %15 = vector.shape_cast %14 : vector<1x8x128xf32> to vector<8x128xf32>
    %c2_4 = arith.constant 2 : index
    %16 = arith.index_cast %9 : i32 to index
    %c0_5 = arith.constant 0 : index
    %17 = vector.load %arg2[%c2_4, %16, %c0_5] : memref<5x8x128xf32, #tpu.memory_space<vmem>>, vector<1x8x128xf32>
    %18 = vector.shape_cast %17 : vector<1x8x128xf32> to vector<8x128xf32>
    %c3_6 = arith.constant 3 : index
    %19 = arith.index_cast %9 : i32 to index
    %c0_7 = arith.constant 0 : index
    %20 = vector.load %arg2[%c3_6, %19, %c0_7] : memref<5x8x128xf32, #tpu.memory_space<vmem>>, vector<1x8x128xf32>
    %21 = vector.shape_cast %20 : vector<1x8x128xf32> to vector<8x128xf32>
    %c4 = arith.constant 4 : index
    %22 = arith.index_cast %9 : i32 to index
    %c0_8 = arith.constant 0 : index
    %23 = vector.load %arg2[%c4, %22, %c0_8] : memref<5x8x128xf32, #tpu.memory_space<vmem>>, vector<1x8x128xf32>
    %24 = vector.shape_cast %23 : vector<1x8x128xf32> to vector<8x128xf32>
    %c0_9 = arith.constant 0 : index
    %25 = arith.index_cast %9 : i32 to index
    %c0_10 = arith.constant 0 : index
    %26 = vector.load %arg3[%c0_9, %25, %c0_10] : memref<4x8x128xf32, #tpu.memory_space<vmem>>, vector<1x8x128xf32>
    %27 = vector.shape_cast %26 : vector<1x8x128xf32> to vector<8x128xf32>
    %c1_11 = arith.constant 1 : index
    %28 = arith.index_cast %9 : i32 to index
    %c0_12 = arith.constant 0 : index
    %29 = vector.load %arg3[%c1_11, %28, %c0_12] : memref<4x8x128xf32, #tpu.memory_space<vmem>>, vector<1x8x128xf32>
    %30 = vector.shape_cast %29 : vector<1x8x128xf32> to vector<8x128xf32>
    %c2_13 = arith.constant 2 : index
    %31 = arith.index_cast %9 : i32 to index
    %c0_14 = arith.constant 0 : index
    %32 = vector.load %arg3[%c2_13, %31, %c0_14] : memref<4x8x128xf32, #tpu.memory_space<vmem>>, vector<1x8x128xf32>
    %33 = vector.shape_cast %32 : vector<1x8x128xf32> to vector<8x128xf32>
    %c3_15 = arith.constant 3 : index
    %34 = arith.index_cast %9 : i32 to index
    %c0_16 = arith.constant 0 : index
    %35 = vector.load %arg3[%c3_15, %34, %c0_16] : memref<4x8x128xf32, #tpu.memory_space<vmem>>, vector<1x8x128xf32>
    %36 = vector.shape_cast %35 : vector<1x8x128xf32> to vector<8x128xf32>
    %c0_17 = arith.constant 0 : index
    %37 = arith.index_cast %9 : i32 to index
    %c0_18 = arith.constant 0 : index
    %38 = vector.load %arg5[%c0_17, %37, %c0_18] : memref<5x8x128xf32, #tpu.memory_space<vmem>>, vector<1x8x128xf32>
    %39 = vector.shape_cast %38 : vector<1x8x128xf32> to vector<8x128xf32>
    %40 = vector.shape_cast %12 : vector<8x128xf32> to vector<1x8x128xf32>
    tpu.vector_store %arg5[%c0_17, %37, %c0_18], %40 {strides = array<i32>} : memref<5x8x128xf32, #tpu.memory_space<vmem>>, vector<1x8x128xf32>,
    %41 = arith.minimumf %15, %27 : vector<8x128xf32>
    %c1_19 = arith.constant 1 : index
    %42 = arith.index_cast %9 : i32 to index
    %c0_20 = arith.constant 0 : index
    %43 = vector.load %arg5[%c1_19, %42, %c0_20] : memref<5x8x128xf32, #tpu.memory_space<vmem>>, vector<1x8x128xf32>
    %44 = vector.shape_cast %43 : vector<1x8x128xf32> to vector<8x128xf32>
    %45 = vector.shape_cast %41 : vector<8x128xf32> to vector<1x8x128xf32>
    tpu.vector_store %arg5[%c1_19, %42, %c0_20], %45 {strides = array<i32>} : memref<5x8x128xf32, #tpu.memory_space<vmem>>, vector<1x8x128xf32>,
    %46 = arith.minimumf %18, %30 : vector<8x128xf32>
    %c2_21 = arith.constant 2 : index
    %47 = arith.index_cast %9 : i32 to index
    %c0_22 = arith.constant 0 : index
    %48 = vector.load %arg5[%c2_21, %47, %c0_22] : memref<5x8x128xf32, #tpu.memory_space<vmem>>, vector<1x8x128xf32>
    %49 = vector.shape_cast %48 : vector<1x8x128xf32> to vector<8x128xf32>
    %50 = vector.shape_cast %46 : vector<8x128xf32> to vector<1x8x128xf32>
    tpu.vector_store %arg5[%c2_21, %47, %c0_22], %50 {strides = array<i32>} : memref<5x8x128xf32, #tpu.memory_space<vmem>>, vector<1x8x128xf32>,
    %51 = arith.maximumf %21, %33 : vector<8x128xf32>
    %c3_23 = arith.constant 3 : index
    %52 = arith.index_cast %9 : i32 to index
    %c0_24 = arith.constant 0 : index
    %53 = vector.load %arg5[%c3_23, %52, %c0_24] : memref<5x8x128xf32, #tpu.memory_space<vmem>>, vector<1x8x128xf32>
    %54 = vector.shape_cast %53 : vector<1x8x128xf32> to vector<8x128xf32>
    %55 = vector.shape_cast %51 : vector<8x128xf32> to vector<1x8x128xf32>
    tpu.vector_store %arg5[%c3_23, %52, %c0_24], %55 {strides = array<i32>} : memref<5x8x128xf32, #tpu.memory_space<vmem>>, vector<1x8x128xf32>,
    %56 = arith.maximumf %24, %36 : vector<8x128xf32>
    %c4_25 = arith.constant 4 : index
    %57 = arith.index_cast %9 : i32 to index
    %c0_26 = arith.constant 0 : index
    %58 = vector.load %arg5[%c4_25, %57, %c0_26] : memref<5x8x128xf32, #tpu.memory_space<vmem>>, vector<1x8x128xf32>
    %59 = vector.shape_cast %58 : vector<1x8x128xf32> to vector<8x128xf32>
    %60 = vector.shape_cast %56 : vector<8x128xf32> to vector<1x8x128xf32>
    tpu.vector_store %arg5[%c4_25, %57, %c0_26], %60 {strides = array<i32>} : memref<5x8x128xf32, #tpu.memory_space<vmem>>, vector<1x8x128xf32>,
    %61 = arith.mulf %15, %1 : vector<8x128xf32>
    %62 = arith.mulf %18, %1 : vector<8x128xf32>
    %63 = arith.mulf %21, %1 : vector<8x128xf32>
    %64 = arith.mulf %24, %1 : vector<8x128xf32>
    %65 = arith.mulf %27, %1 : vector<8x128xf32>
    %66 = arith.mulf %30, %1 : vector<8x128xf32>
    %67 = arith.mulf %33, %1 : vector<8x128xf32>
    %68 = arith.mulf %36, %1 : vector<8x128xf32>
    %69 = arith.subf %63, %61 : vector<8x128xf32>
    %cst = arith.constant 1.000000e+00 : f32
    %70 = vector.broadcast %cst : f32 to vector<8x128xf32>
    %71 = arith.addf %69, %70 : vector<8x128xf32>
    %72 = arith.subf %64, %62 : vector<8x128xf32>
    %cst_27 = arith.constant 1.000000e+00 : f32
    %73 = vector.broadcast %cst_27 : f32 to vector<8x128xf32>
    %74 = arith.addf %72, %73 : vector<8x128xf32>
    %75 = arith.subf %67, %65 : vector<8x128xf32>
    %cst_28 = arith.constant 1.000000e+00 : f32
    %76 = vector.broadcast %cst_28 : f32 to vector<8x128xf32>
    %77 = arith.addf %75, %76 : vector<8x128xf32>
    %78 = arith.subf %68, %66 : vector<8x128xf32>
    %cst_29 = arith.constant 1.000000e+00 : f32
    %79 = vector.broadcast %cst_29 : f32 to vector<8x128xf32>
    %80 = arith.addf %78, %79 : vector<8x128xf32>
    %81 = arith.mulf %71, %74 : vector<8x128xf32>
    %82 = arith.mulf %77, %80 : vector<8x128xf32>
    %83 = arith.minimumf %63, %67 : vector<8x128xf32>
    %84 = arith.maximumf %61, %65 : vector<8x128xf32>
    %85 = arith.subf %83, %84 : vector<8x128xf32>
    %cst_30 = arith.constant 1.000000e+00 : f32
    %86 = vector.broadcast %cst_30 : f32 to vector<8x128xf32>
    %87 = arith.addf %85, %86 : vector<8x128xf32>
    %cst_31 = arith.constant 0.000000e+00 : f32
    %88 = vector.broadcast %cst_31 : f32 to vector<8x128xf32>
    %89 = arith.maximumf %87, %88 : vector<8x128xf32>
    %90 = arith.minimumf %64, %68 : vector<8x128xf32>
    %91 = arith.maximumf %62, %66 : vector<8x128xf32>
    %92 = arith.subf %90, %91 : vector<8x128xf32>
    %cst_32 = arith.constant 1.000000e+00 : f32
    %93 = vector.broadcast %cst_32 : f32 to vector<8x128xf32>
    %94 = arith.addf %92, %93 : vector<8x128xf32>
    %cst_33 = arith.constant 0.000000e+00 : f32
    %95 = vector.broadcast %cst_33 : f32 to vector<8x128xf32>
    %96 = arith.maximumf %94, %95 : vector<8x128xf32>
    %97 = arith.mulf %89, %96 : vector<8x128xf32>
    %c0_34 = arith.constant 0 : index
    %98 = arith.index_cast %9 : i32 to index
    %c0_35 = arith.constant 0 : index
    %99 = vector.load %arg4[%c0_34, %98, %c0_35] : memref<1x8x128xf32, #tpu.memory_space<vmem>>, vector<1x8x128xf32>
    %100 = vector.shape_cast %99 : vector<1x8x128xf32> to vector<8x128xf32>
    %101 = vector.shape_cast %97 : vector<8x128xf32> to vector<1x8x128xf32>
    tpu.vector_store %arg4[%c0_34, %98, %c0_35], %101 {strides = array<i32>} : memref<1x8x128xf32, #tpu.memory_space<vmem>>, vector<1x8x128xf32>,
    %102 = arith.minimumf %61, %65 : vector<8x128xf32>
    %103 = arith.minimumf %62, %66 : vector<8x128xf32>
    %104 = arith.maximumf %63, %67 : vector<8x128xf32>
    %105 = arith.maximumf %64, %68 : vector<8x128xf32>
    %106 = arith.subf %104, %102 : vector<8x128xf32>
    %cst_36 = arith.constant 1.000000e+00 : f32
    %107 = vector.broadcast %cst_36 : f32 to vector<8x128xf32>
    %108 = arith.addf %106, %107 : vector<8x128xf32>
    %109 = arith.subf %105, %103 : vector<8x128xf32>
    %cst_37 = arith.constant 1.000000e+00 : f32
    %110 = vector.broadcast %cst_37 : f32 to vector<8x128xf32>
    %111 = arith.addf %109, %110 : vector<8x128xf32>
    %112 = tpu.reciprocal %71 : vector<8x128xf32> -> vector<8x128xf32>
    %113 = tpu.reciprocal %74 : vector<8x128xf32> -> vector<8x128xf32>
    %114 = tpu.reciprocal %77 : vector<8x128xf32> -> vector<8x128xf32>
    %115 = tpu.reciprocal %80 : vector<8x128xf32> -> vector<8x128xf32>
    %116 = tpu.reciprocal %108 : vector<8x128xf32> -> vector<8x128xf32>
    %117 = tpu.reciprocal %111 : vector<8x128xf32> -> vector<8x128xf32>
    %118 = math.log %71 : vector<8x128xf32>
    %119 = math.log %74 : vector<8x128xf32>
    %120 = math.log %77 : vector<8x128xf32>
    %121 = math.log %80 : vector<8x128xf32>
    %122 = math.log %108 : vector<8x128xf32>
    %123 = math.log %111 : vector<8x128xf32>
    %cst_38 = arith.constant 5.000000e-01 : f32
    %124 = vector.broadcast %cst_38 : f32 to vector<8x128xf32>
    %125 = arith.mulf %124, %71 : vector<8x128xf32>
    %126 = arith.addf %61, %125 : vector<8x128xf32>
    %cst_39 = arith.constant 5.000000e-01 : f32
    %127 = vector.broadcast %cst_39 : f32 to vector<8x128xf32>
    %128 = arith.mulf %127, %74 : vector<8x128xf32>
    %129 = arith.addf %62, %128 : vector<8x128xf32>
    %cst_40 = arith.constant 5.000000e-01 : f32
    %130 = vector.broadcast %cst_40 : f32 to vector<8x128xf32>
    %131 = arith.mulf %130, %77 : vector<8x128xf32>
    %132 = arith.addf %65, %131 : vector<8x128xf32>
    %cst_41 = arith.constant 5.000000e-01 : f32
    %133 = vector.broadcast %cst_41 : f32 to vector<8x128xf32>
    %134 = arith.mulf %133, %80 : vector<8x128xf32>
    %135 = arith.addf %66, %134 : vector<8x128xf32>
    %cst_42 = arith.constant 5.000000e-01 : f32
    %136 = vector.broadcast %cst_42 : f32 to vector<8x128xf32>
    %137 = arith.mulf %136, %108 : vector<8x128xf32>
    %138 = arith.addf %102, %137 : vector<8x128xf32>
    %cst_43 = arith.constant 5.000000e-01 : f32
    %139 = vector.broadcast %cst_43 : f32 to vector<8x128xf32>
    %140 = arith.mulf %139, %111 : vector<8x128xf32>
    %141 = arith.addf %103, %140 : vector<8x128xf32>
    %142 = arith.subf %132, %126 : vector<8x128xf32>
    %143 = arith.mulf %142, %112 : vector<8x128xf32>
    %c0_44 = arith.constant 0 : index
    %144 = arith.index_cast %9 : i32 to index
    %c0_45 = arith.constant 0 : index
    %145 = vector.load %arg6[%c0_44, %144, %c0_45] : memref<28x8x128xf32, #tpu.memory_space<vmem>>, vector<1x8x128xf32>
    %146 = vector.shape_cast %145 : vector<1x8x128xf32> to vector<8x128xf32>
    %147 = vector.shape_cast %143 : vector<8x128xf32> to vector<1x8x128xf32>
    tpu.vector_store %arg6[%c0_44, %144, %c0_45], %147 {strides = array<i32>} : memref<28x8x128xf32, #tpu.memory_space<vmem>>, vector<1x8x128xf32>,
    %148 = arith.subf %135, %129 : vector<8x128xf32>
    %149 = arith.mulf %148, %113 : vector<8x128xf32>
    %c1_46 = arith.constant 1 : index
    %150 = arith.index_cast %9 : i32 to index
    %c0_47 = arith.constant 0 : index
    %151 = vector.load %arg6[%c1_46, %150, %c0_47] : memref<28x8x128xf32, #tpu.memory_space<vmem>>, vector<1x8x128xf32>
    %152 = vector.shape_cast %151 : vector<1x8x128xf32> to vector<8x128xf32>
    %153 = vector.shape_cast %149 : vector<8x128xf32> to vector<1x8x128xf32>
    tpu.vector_store %arg6[%c1_46, %150, %c0_47], %153 {strides = array<i32>} : memref<28x8x128xf32, #tpu.memory_space<vmem>>, vector<1x8x128xf32>,
    %154 = arith.subf %120, %118 : vector<8x128xf32>
    %c2_48 = arith.constant 2 : index
    %155 = arith.index_cast %9 : i32 to index
    %c0_49 = arith.constant 0 : index
    %156 = vector.load %arg6[%c2_48, %155, %c0_49] : memref<28x8x128xf32, #tpu.memory_space<vmem>>, vector<1x8x128xf32>
    %157 = vector.shape_cast %156 : vector<1x8x128xf32> to vector<8x128xf32>
    %158 = vector.shape_cast %154 : vector<8x128xf32> to vector<1x8x128xf32>
    tpu.vector_store %arg6[%c2_48, %155, %c0_49], %158 {strides = array<i32>} : memref<28x8x128xf32, #tpu.memory_space<vmem>>, vector<1x8x128xf32>,
    %159 = arith.subf %121, %119 : vector<8x128xf32>
    %c3_50 = arith.constant 3 : index
    %160 = arith.index_cast %9 : i32 to index
    %c0_51 = arith.constant 0 : index
    %161 = vector.load %arg6[%c3_50, %160, %c0_51] : memref<28x8x128xf32, #tpu.memory_space<vmem>>, vector<1x8x128xf32>
    %162 = vector.shape_cast %161 : vector<1x8x128xf32> to vector<8x128xf32>
    %163 = vector.shape_cast %159 : vector<8x128xf32> to vector<1x8x128xf32>
    tpu.vector_store %arg6[%c3_50, %160, %c0_51], %163 {strides = array<i32>} : memref<28x8x128xf32, #tpu.memory_space<vmem>>, vector<1x8x128xf32>,
    %164 = arith.subf %126, %132 : vector<8x128xf32>
    %165 = arith.mulf %164, %114 : vector<8x128xf32>
    %c4_52 = arith.constant 4 : index
    %166 = arith.index_cast %9 : i32 to index
    %c0_53 = arith.constant 0 : index
    %167 = vector.load %arg6[%c4_52, %166, %c0_53] : memref<28x8x128xf32, #tpu.memory_space<vmem>>, vector<1x8x128xf32>
    %168 = vector.shape_cast %167 : vector<1x8x128xf32> to vector<8x128xf32>
    %169 = vector.shape_cast %165 : vector<8x128xf32> to vector<1x8x128xf32>
    tpu.vector_store %arg6[%c4_52, %166, %c0_53], %169 {strides = array<i32>} : memref<28x8x128xf32, #tpu.memory_space<vmem>>, vector<1x8x128xf32>,
    %170 = arith.subf %129, %135 : vector<8x128xf32>
    %171 = arith.mulf %170, %115 : vector<8x128xf32>
    %c5 = arith.constant 5 : index
    %172 = arith.index_cast %9 : i32 to index
    %c0_54 = arith.constant 0 : index
    %173 = vector.load %arg6[%c5, %172, %c0_54] : memref<28x8x128xf32, #tpu.memory_space<vmem>>, vector<1x8x128xf32>
    %174 = vector.shape_cast %173 : vector<1x8x128xf32> to vector<8x128xf32>
    %175 = vector.shape_cast %171 : vector<8x128xf32> to vector<1x8x128xf32>
    tpu.vector_store %arg6[%c5, %172, %c0_54], %175 {strides = array<i32>} : memref<28x8x128xf32, #tpu.memory_space<vmem>>, vector<1x8x128xf32>,
    %176 = arith.subf %138, %126 : vector<8x128xf32>
    %177 = arith.mulf %176, %112 : vector<8x128xf32>
    %c6 = arith.constant 6 : index
    %178 = arith.index_cast %9 : i32 to index
    %c0_55 = arith.constant 0 : index
    %179 = vector.load %arg6[%c6, %178, %c0_55] : memref<28x8x128xf32, #tpu.memory_space<vmem>>, vector<1x8x128xf32>
    %180 = vector.shape_cast %179 : vector<1x8x128xf32> to vector<8x128xf32>
    %181 = vector.shape_cast %177 : vector<8x128xf32> to vector<1x8x128xf32>
    tpu.vector_store %arg6[%c6, %178, %c0_55], %181 {strides = array<i32>} : memref<28x8x128xf32, #tpu.memory_space<vmem>>, vector<1x8x128xf32>,
    %182 = arith.subf %141, %129 : vector<8x128xf32>
    %183 = arith.mulf %182, %113 : vector<8x128xf32>
    %c7 = arith.constant 7 : index
    %184 = arith.index_cast %9 : i32 to index
    %c0_56 = arith.constant 0 : index
    %185 = vector.load %arg6[%c7, %184, %c0_56] : memref<28x8x128xf32, #tpu.memory_space<vmem>>, vector<1x8x128xf32>
    %186 = vector.shape_cast %185 : vector<1x8x128xf32> to vector<8x128xf32>
    %187 = vector.shape_cast %183 : vector<8x128xf32> to vector<1x8x128xf32>
    tpu.vector_store %arg6[%c7, %184, %c0_56], %187 {strides = array<i32>} : memref<28x8x128xf32, #tpu.memory_space<vmem>>, vector<1x8x128xf32>,
    %188 = arith.subf %122, %118 : vector<8x128xf32>
    %c8 = arith.constant 8 : index
    %189 = arith.index_cast %9 : i32 to index
    %c0_57 = arith.constant 0 : index
    %190 = vector.load %arg6[%c8, %189, %c0_57] : memref<28x8x128xf32, #tpu.memory_space<vmem>>, vector<1x8x128xf32>
    %191 = vector.shape_cast %190 : vector<1x8x128xf32> to vector<8x128xf32>
    %192 = vector.shape_cast %188 : vector<8x128xf32> to vector<1x8x128xf32>
    tpu.vector_store %arg6[%c8, %189, %c0_57], %192 {strides = array<i32>} : memref<28x8x128xf32, #tpu.memory_space<vmem>>, vector<1x8x128xf32>,
    %193 = arith.subf %123, %119 : vector<8x128xf32>
    %c9 = arith.constant 9 : index
    %194 = arith.index_cast %9 : i32 to index
    %c0_58 = arith.constant 0 : index
    %195 = vector.load %arg6[%c9, %194, %c0_58] : memref<28x8x128xf32, #tpu.memory_space<vmem>>, vector<1x8x128xf32>
    %196 = vector.shape_cast %195 : vector<1x8x128xf32> to vector<8x128xf32>
    %197 = vector.shape_cast %193 : vector<8x128xf32> to vector<1x8x128xf32>
    tpu.vector_store %arg6[%c9, %194, %c0_58], %197 {strides = array<i32>} : memref<28x8x128xf32, #tpu.memory_space<vmem>>, vector<1x8x128xf32>,
    %198 = arith.subf %126, %138 : vector<8x128xf32>
    %199 = arith.mulf %198, %116 : vector<8x128xf32>
    %c10 = arith.constant 10 : index
    %200 = arith.index_cast %9 : i32 to index
    %c0_59 = arith.constant 0 : index
    %201 = vector.load %arg6[%c10, %200, %c0_59] : memref<28x8x128xf32, #tpu.memory_space<vmem>>, vector<1x8x128xf32>
    %202 = vector.shape_cast %201 : vector<1x8x128xf32> to vector<8x128xf32>
    %203 = vector.shape_cast %199 : vector<8x128xf32> to vector<1x8x128xf32>
    tpu.vector_store %arg6[%c10, %200, %c0_59], %203 {strides = array<i32>} : memref<28x8x128xf32, #tpu.memory_space<vmem>>, vector<1x8x128xf32>,
    %204 = arith.subf %129, %141 : vector<8x128xf32>
    %205 = arith.mulf %204, %117 : vector<8x128xf32>
    %c11 = arith.constant 11 : index
    %206 = arith.index_cast %9 : i32 to index
    %c0_60 = arith.constant 0 : index
    %207 = vector.load %arg6[%c11, %206, %c0_60] : memref<28x8x128xf32, #tpu.memory_space<vmem>>, vector<1x8x128xf32>
    %208 = vector.shape_cast %207 : vector<1x8x128xf32> to vector<8x128xf32>
    %209 = vector.shape_cast %205 : vector<8x128xf32> to vector<1x8x128xf32>
    tpu.vector_store %arg6[%c11, %206, %c0_60], %209 {strides = array<i32>} : memref<28x8x128xf32, #tpu.memory_space<vmem>>, vector<1x8x128xf32>,
    %210 = arith.subf %132, %138 : vector<8x128xf32>
    %211 = arith.mulf %210, %116 : vector<8x128xf32>
    %c12 = arith.constant 12 : index
    %212 = arith.index_cast %9 : i32 to index
    %c0_61 = arith.constant 0 : index
    %213 = vector.load %arg6[%c12, %212, %c0_61] : memref<28x8x128xf32, #tpu.memory_space<vmem>>, vector<1x8x128xf32>
    %214 = vector.shape_cast %213 : vector<1x8x128xf32> to vector<8x128xf32>
    %215 = vector.shape_cast %211 : vector<8x128xf32> to vector<1x8x128xf32>
    tpu.vector_store %arg6[%c12, %212, %c0_61], %215 {strides = array<i32>} : memref<28x8x128xf32, #tpu.memory_space<vmem>>, vector<1x8x128xf32>,
    %216 = arith.subf %135, %141 : vector<8x128xf32>
    %217 = arith.mulf %216, %117 : vector<8x128xf32>
    %c13 = arith.constant 13 : index
    %218 = arith.index_cast %9 : i32 to index
    %c0_62 = arith.constant 0 : index
    %219 = vector.load %arg6[%c13, %218, %c0_62] : memref<28x8x128xf32, #tpu.memory_space<vmem>>, vector<1x8x128xf32>
    %220 = vector.shape_cast %219 : vector<1x8x128xf32> to vector<8x128xf32>
    %221 = vector.shape_cast %217 : vector<8x128xf32> to vector<1x8x128xf32>
    tpu.vector_store %arg6[%c13, %218, %c0_62], %221 {strides = array<i32>} : memref<28x8x128xf32, #tpu.memory_space<vmem>>, vector<1x8x128xf32>,
    %222 = arith.subf %120, %122 : vector<8x128xf32>
    %c14 = arith.constant 14 : index
    %223 = arith.index_cast %9 : i32 to index
    %c0_63 = arith.constant 0 : index
    %224 = vector.load %arg6[%c14, %223, %c0_63] : memref<28x8x128xf32, #tpu.memory_space<vmem>>, vector<1x8x128xf32>
    %225 = vector.shape_cast %224 : vector<1x8x128xf32> to vector<8x128xf32>
    %226 = vector.shape_cast %222 : vector<8x128xf32> to vector<1x8x128xf32>
    tpu.vector_store %arg6[%c14, %223, %c0_63], %226 {strides = array<i32>} : memref<28x8x128xf32, #tpu.memory_space<vmem>>, vector<1x8x128xf32>,
    %227 = arith.subf %121, %123 : vector<8x128xf32>
    %c15 = arith.constant 15 : index
    %228 = arith.index_cast %9 : i32 to index
    %c0_64 = arith.constant 0 : index
    %229 = vector.load %arg6[%c15, %228, %c0_64] : memref<28x8x128xf32, #tpu.memory_space<vmem>>, vector<1x8x128xf32>
    %230 = vector.shape_cast %229 : vector<1x8x128xf32> to vector<8x128xf32>
    %231 = vector.shape_cast %227 : vector<8x128xf32> to vector<1x8x128xf32>
    tpu.vector_store %arg6[%c15, %228, %c0_64], %231 {strides = array<i32>} : memref<28x8x128xf32, #tpu.memory_space<vmem>>, vector<1x8x128xf32>,
    %232 = arith.subf %138, %132 : vector<8x128xf32>
    %233 = arith.mulf %232, %114 : vector<8x128xf32>
    %c16 = arith.constant 16 : index
    %234 = arith.index_cast %9 : i32 to index
    %c0_65 = arith.constant 0 : index
    %235 = vector.load %arg6[%c16, %234, %c0_65] : memref<28x8x128xf32, #tpu.memory_space<vmem>>, vector<1x8x128xf32>
    %236 = vector.shape_cast %235 : vector<1x8x128xf32> to vector<8x128xf32>
    %237 = vector.shape_cast %233 : vector<8x128xf32> to vector<1x8x128xf32>
    tpu.vector_store %arg6[%c16, %234, %c0_65], %237 {strides = array<i32>} : memref<28x8x128xf32, #tpu.memory_space<vmem>>, vector<1x8x128xf32>,
    %238 = arith.subf %141, %135 : vector<8x128xf32>
    %239 = arith.mulf %238, %115 : vector<8x128xf32>
    %c17 = arith.constant 17 : index
    %240 = arith.index_cast %9 : i32 to index
    %c0_66 = arith.constant 0 : index
    %241 = vector.load %arg6[%c17, %240, %c0_66] : memref<28x8x128xf32, #tpu.memory_space<vmem>>, vector<1x8x128xf32>
    %242 = vector.shape_cast %241 : vector<1x8x128xf32> to vector<8x128xf32>
    %243 = vector.shape_cast %239 : vector<8x128xf32> to vector<1x8x128xf32>
    tpu.vector_store %arg6[%c17, %240, %c0_66], %243 {strides = array<i32>} : memref<28x8x128xf32, #tpu.memory_space<vmem>>, vector<1x8x128xf32>,
    %244 = arith.mulf %61, %3 : vector<8x128xf32>
    %c18 = arith.constant 18 : index
    %245 = arith.index_cast %9 : i32 to index
    %c0_67 = arith.constant 0 : index
    %246 = vector.load %arg6[%c18, %245, %c0_67] : memref<28x8x128xf32, #tpu.memory_space<vmem>>, vector<1x8x128xf32>
    %247 = vector.shape_cast %246 : vector<1x8x128xf32> to vector<8x128xf32>
    %248 = vector.shape_cast %244 : vector<8x128xf32> to vector<1x8x128xf32>
    tpu.vector_store %arg6[%c18, %245, %c0_67], %248 {strides = array<i32>} : memref<28x8x128xf32, #tpu.memory_space<vmem>>, vector<1x8x128xf32>,
    %249 = arith.mulf %62, %5 : vector<8x128xf32>
    %c19 = arith.constant 19 : index
    %250 = arith.index_cast %9 : i32 to index
    %c0_68 = arith.constant 0 : index
    %251 = vector.load %arg6[%c19, %250, %c0_68] : memref<28x8x128xf32, #tpu.memory_space<vmem>>, vector<1x8x128xf32>
    %252 = vector.shape_cast %251 : vector<1x8x128xf32> to vector<8x128xf32>
    %253 = vector.shape_cast %249 : vector<8x128xf32> to vector<1x8x128xf32>
    tpu.vector_store %arg6[%c19, %250, %c0_68], %253 {strides = array<i32>} : memref<28x8x128xf32, #tpu.memory_space<vmem>>, vector<1x8x128xf32>,
    %254 = arith.mulf %63, %3 : vector<8x128xf32>
    %c20 = arith.constant 20 : index
    %255 = arith.index_cast %9 : i32 to index
    %c0_69 = arith.constant 0 : index
    %256 = vector.load %arg6[%c20, %255, %c0_69] : memref<28x8x128xf32, #tpu.memory_space<vmem>>, vector<1x8x128xf32>
    %257 = vector.shape_cast %256 : vector<1x8x128xf32> to vector<8x128xf32>
    %258 = vector.shape_cast %254 : vector<8x128xf32> to vector<1x8x128xf32>
    tpu.vector_store %arg6[%c20, %255, %c0_69], %258 {strides = array<i32>} : memref<28x8x128xf32, #tpu.memory_space<vmem>>, vector<1x8x128xf32>,
    %259 = arith.mulf %64, %5 : vector<8x128xf32>
    %c21 = arith.constant 21 : index
    %260 = arith.index_cast %9 : i32 to index
    %c0_70 = arith.constant 0 : index
    %261 = vector.load %arg6[%c21, %260, %c0_70] : memref<28x8x128xf32, #tpu.memory_space<vmem>>, vector<1x8x128xf32>
    %262 = vector.shape_cast %261 : vector<1x8x128xf32> to vector<8x128xf32>
    %263 = vector.shape_cast %259 : vector<8x128xf32> to vector<1x8x128xf32>
    tpu.vector_store %arg6[%c21, %260, %c0_70], %263 {strides = array<i32>} : memref<28x8x128xf32, #tpu.memory_space<vmem>>, vector<1x8x128xf32>,
    %264 = arith.mulf %81, %7 : vector<8x128xf32>
    %c22 = arith.constant 22 : index
    %265 = arith.index_cast %9 : i32 to index
    %c0_71 = arith.constant 0 : index
    %266 = vector.load %arg6[%c22, %265, %c0_71] : memref<28x8x128xf32, #tpu.memory_space<vmem>>, vector<1x8x128xf32>
    %267 = vector.shape_cast %266 : vector<1x8x128xf32> to vector<8x128xf32>
    %268 = vector.shape_cast %264 : vector<8x128xf32> to vector<1x8x128xf32>
    tpu.vector_store %arg6[%c22, %265, %c0_71], %268 {strides = array<i32>} : memref<28x8x128xf32, #tpu.memory_space<vmem>>, vector<1x8x128xf32>,
    %269 = arith.mulf %65, %3 : vector<8x128xf32>
    %c23 = arith.constant 23 : index
    %270 = arith.index_cast %9 : i32 to index
    %c0_72 = arith.constant 0 : index
    %271 = vector.load %arg6[%c23, %270, %c0_72] : memref<28x8x128xf32, #tpu.memory_space<vmem>>, vector<1x8x128xf32>
    %272 = vector.shape_cast %271 : vector<1x8x128xf32> to vector<8x128xf32>
    %273 = vector.shape_cast %269 : vector<8x128xf32> to vector<1x8x128xf32>
    tpu.vector_store %arg6[%c23, %270, %c0_72], %273 {strides = array<i32>} : memref<28x8x128xf32, #tpu.memory_space<vmem>>, vector<1x8x128xf32>,
    %274 = arith.mulf %66, %5 : vector<8x128xf32>
    %c24 = arith.constant 24 : index
    %275 = arith.index_cast %9 : i32 to index
    %c0_73 = arith.constant 0 : index
    %276 = vector.load %arg6[%c24, %275, %c0_73] : memref<28x8x128xf32, #tpu.memory_space<vmem>>, vector<1x8x128xf32>
    %277 = vector.shape_cast %276 : vector<1x8x128xf32> to vector<8x128xf32>
    %278 = vector.shape_cast %274 : vector<8x128xf32> to vector<1x8x128xf32>
    tpu.vector_store %arg6[%c24, %275, %c0_73], %278 {strides = array<i32>} : memref<28x8x128xf32, #tpu.memory_space<vmem>>, vector<1x8x128xf32>,
    %279 = arith.mulf %67, %3 : vector<8x128xf32>
    %c25 = arith.constant 25 : index
    %280 = arith.index_cast %9 : i32 to index
    %c0_74 = arith.constant 0 : index
    %281 = vector.load %arg6[%c25, %280, %c0_74] : memref<28x8x128xf32, #tpu.memory_space<vmem>>, vector<1x8x128xf32>
    %282 = vector.shape_cast %281 : vector<1x8x128xf32> to vector<8x128xf32>
    %283 = vector.shape_cast %279 : vector<8x128xf32> to vector<1x8x128xf32>
    tpu.vector_store %arg6[%c25, %280, %c0_74], %283 {strides = array<i32>} : memref<28x8x128xf32, #tpu.memory_space<vmem>>, vector<1x8x128xf32>,
    %284 = arith.mulf %68, %5 : vector<8x128xf32>
    %c26 = arith.constant 26 : index
    %285 = arith.index_cast %9 : i32 to index
    %c0_75 = arith.constant 0 : index
    %286 = vector.load %arg6[%c26, %285, %c0_75] : memref<28x8x128xf32, #tpu.memory_space<vmem>>, vector<1x8x128xf32>
    %287 = vector.shape_cast %286 : vector<1x8x128xf32> to vector<8x128xf32>
    %288 = vector.shape_cast %284 : vector<8x128xf32> to vector<1x8x128xf32>
    tpu.vector_store %arg6[%c26, %285, %c0_75], %288 {strides = array<i32>} : memref<28x8x128xf32, #tpu.memory_space<vmem>>, vector<1x8x128xf32>,
    %289 = arith.mulf %82, %7 : vector<8x128xf32>
    %c27 = arith.constant 27 : index
    %290 = arith.index_cast %9 : i32 to index
    %c0_76 = arith.constant 0 : index
    %291 = vector.load %arg6[%c27, %290, %c0_76] : memref<28x8x128xf32, #tpu.memory_space<vmem>>, vector<1x8x128xf32>
    %292 = vector.shape_cast %291 : vector<1x8x128xf32> to vector<8x128xf32>
    %293 = vector.shape_cast %289 : vector<8x128xf32> to vector<1x8x128xf32>
    tpu.vector_store %arg6[%c27, %290, %c0_76], %293 {strides = array<i32>} : memref<28x8x128xf32, #tpu.memory_space<vmem>>, vector<1x8x128xf32>,
    %c1_i32 = arith.constant 1 : i32
    return
  }
  func.func @transform_0(%arg0: i32) -> i32 {
    %c0_i32 = arith.constant 0 : i32
    %c0_i32_0 = arith.constant 0 : i32
    return %c0_i32 : i32
  }
  func.func @transform_1(%arg0: i32) -> (i32, i32, i32) {
    %c0_i32 = arith.constant 0 : i32
    %c0_i32_0 = arith.constant 0 : i32
    %c0_i32_1 = arith.constant 0 : i32
    return %c0_i32, %arg0, %c0_i32_0 : i32, i32, i32
  }
  func.func @transform_2(%arg0: i32) -> (i32, i32, i32) {
    %c0_i32 = arith.constant 0 : i32
    %c0_i32_0 = arith.constant 0 : i32
    %c0_i32_1 = arith.constant 0 : i32
    return %c0_i32, %arg0, %c0_i32_0 : i32, i32, i32
  }
  func.func @transform_3(%arg0: i32) -> (i32, i32, i32) {
    %c0_i32 = arith.constant 0 : i32
    %c0_i32_0 = arith.constant 0 : i32
    %c0_i32_1 = arith.constant 0 : i32
    return %c0_i32, %arg0, %c0_i32_0 : i32, i32, i32
  }
  func.func @transform_4(%arg0: i32) -> (i32, i32, i32) {
    %c0_i32 = arith.constant 0 : i32
    %c0_i32_0 = arith.constant 0 : i32
    %c0_i32_1 = arith.constant 0 : i32
    return %c0_i32, %arg0, %c0_i32_0 : i32, i32, i32
  }
  func.func @transform_5(%arg0: i32) -> (i32, i32, i32) {
    %c0_i32 = arith.constant 0 : i32
    %c0_i32_0 = arith.constant 0 : i32
    %c0_i32_1 = arith.constant 0 : i32
    return %c0_i32, %arg0, %c0_i32_0 : i32, i32, i32
  }
}

</mosaic_0001>

<llo_original>
// kernel: _relpn_pairs_device.1
$region0: #{_relpn_pairs_device.1}
  #allocation0 [shape = 'u32[]', space=smem, size = 0x4, offset = 0x4, fixed_abs, tag = 'smem constant byte address 0x4 - core index']
  #allocation1 [shape = 'u32[144,128]{1,0:T(1,128)}', space=vmem, size = 0x12000, scoped, tag = 'internal scratch']
  %s0 = inlined_call_operand.vmem [shape: f32[4], index: 0, kind: input, shape index: {}]
  %s1 = inlined_call_operand.hbm [shape: f32[5,8,128], index: 1, kind: input, shape index: {}]
  %s2 = inlined_call_operand.hbm [shape: f32[4,8,128], index: 2, kind: input, shape index: {}]
  %s3 = inlined_call_operand.hbm [shape: f32[1,8,128], index: 3, kind: output, shape index: {0}]
  %s4 = inlined_call_operand.vmem [shape: f32[5,8,128], index: 4, kind: output, shape index: {1}]
  %s5 = inlined_call_operand.vmem [shape: f32[28,8,128], index: 5, kind: output, shape index: {2}]
  %6 = xla_tuple %s3, %s4, %s5
  %s7 = sld [smem:[#allocation0]]
  $region50: #{_relpn_pairs_device.1} parent=0
    _
  %s9 = ssub.s32 1, %s7
  %s10 = scalar_select 0, %s9, %s7
  $region1: #{_relpn_pairs_device.1} parent=0
    #allocation2 [shape = 'u8[512]{0}', space=smem, size = 0x200, scoped, tag = 'input window, operand 0, single buffered']
    #allocation3 [shape = 's32[1]{0}', space=sflag, size = 0x4, scoped, tag = 'scoped memory for _relpn_pairs_device.1']
    #allocation4 [shape = 's32[1]{0}', space=sflag, size = 0x4, scoped, tag = 'scoped memory for _relpn_pairs_device.1']
    #allocation5 [shape = 's32[1]{0}', space=sflag, size = 0x4, scoped, tag = 'scoped memory for _relpn_pairs_device.1']
    #allocation6 [shape = 'u8[20480]{0}', space=vmem, size = 0x5000, scoped, tag = 'input window, operand 1, single buffered']
    #allocation7 [shape = 'u8[16384]{0}', space=vmem, size = 0x4000, scoped, tag = 'input window, operand 2, single buffered']
    #allocation8 [shape = 's32[1]{0}', space=sflag, size = 0x4, scoped, tag = 'scoped memory for _relpn_pairs_device.1']
    #allocation9 [shape = 'u8[4096]{0}', space=vmem, size = 0x1000, scoped, tag = 'output window, operand 0, single buffered']
    %11 = vsyncpa [#allocation5], 0
    %12 = vsyncpa [#allocation3], 0
    %13 = vsyncpa [#allocation8], 0
    %14 = vsyncpa [#allocation4], 0
    // Predicated region
    $region2: #{_relpn_pairs_device.1} parent=1 // pred_check
      _
    $region3: #{_relpn_pairs_device.1} parent=1 // pred_check_branch
      %16 = sbr.rel (0) target = $region5
    $region4: #{_relpn_pairs_device.1} parent=1 // pred_region
      %s18 = ssub.s32 16, 16
      %19 = vsyncadd [#allocation5], %s18
      %s21 = sshll.u32 %s0, 4
      %s22 = int_to_ptr.vmem [resolvable:$true] %s21
      %24 = dma.vmem_to_smem %s22, 16, [#allocation2], [#allocation5]
    $region5: #{_relpn_pairs_device.1} parent=1 // pred_fallthru
      _
    // Predicated region
    $region6: #{_relpn_pairs_device.1} parent=1 // pred_check
      _
    $region7: #{_relpn_pairs_device.1} parent=1 // pred_check_branch
      %26 = sbr.rel (0) target = $region9
    $region8: #{_relpn_pairs_device.1} parent=1 // pred_region
      %s28 = ssub.s32 640, 640
      %29 = vsyncadd [#allocation3], %s28
      %s30 = sshll.u32 [#allocation6], 4
      %s31 = int_to_ptr.vmem [resolvable:$true] %s30
      %36 = dma.hbm_to_vmem [thread:$0]  %s1, 640, %s31, [#allocation3], 128, 128, 8
    $region9: #{_relpn_pairs_device.1} parent=1 // pred_fallthru
      _
    // Predicated region
    $region10: #{_relpn_pairs_device.1} parent=1 // pred_check
      _
    $region11: #{_relpn_pairs_device.1} parent=1 // pred_check_branch
      %38 = sbr.rel (0) target = $region13
    $region12: #{_relpn_pairs_device.1} parent=1 // pred_region
      %s40 = ssub.s32 512, 512
      %41 = vsyncadd [#allocation8], %s40
      %s42 = sshll.u32 [#allocation7], 4
      %s43 = int_to_ptr.vmem [resolvable:$true] %s42
      %48 = dma.hbm_to_vmem [thread:$0]  %s2, 512, %s43, [#allocation8], 128, 128, 8
    $region13: #{_relpn_pairs_device.1} parent=1 // pred_fallthru
      _
    // Predicated region
    $region14: #{_relpn_pairs_device.1} parent=1 // pred_check
      _
    $region15: #{_relpn_pairs_device.1} parent=1 // pred_check_branch
      %50 = sbr.rel (0) target = $region17
    $region16: #{_relpn_pairs_device.1} parent=1 // pred_region
      %51 = dma.done [#allocation5], 16
    $region17: #{_relpn_pairs_device.1} parent=1 // pred_fallthru
      _
    // Predicated region
    $region18: #{_relpn_pairs_device.1} parent=1 // pred_check
      _
    $region19: #{_relpn_pairs_device.1} parent=1 // pred_check_branch
      %53 = sbr.rel (0) target = $region21
    $region20: #{_relpn_pairs_device.1} parent=1 // pred_region
      %54 = dma.done [#allocation3], 640
    $region21: #{_relpn_pairs_device.1} parent=1 // pred_fallthru
      _
    // Predicated region
    $region22: #{_relpn_pairs_device.1} parent=1 // pred_check
      _
    $region23: #{_relpn_pairs_device.1} parent=1 // pred_check_branch
      %56 = sbr.rel (0) target = $region25
    $region24: #{_relpn_pairs_device.1} parent=1 // pred_region
      %57 = dma.done [#allocation8], 512
    $region25: #{_relpn_pairs_device.1} parent=1 // pred_fallthru
      _
    %58 = sfence
    %s59 = sld [smem:[#allocation2]]
    %v60 = vstv %s59
    %s61 = sld [smem:[#allocation2 + $0x1]]
    %v62 = vstv %s61
    %s63 = sld [smem:[#allocation2 + $0x2]]
    %v64 = vstv %s63
    %s65 = sld [smem:[#allocation2 + $0x3]]
    %v66 = vstv %s65
    %v67 = vld [vmem:[#allocation6] sm:$0xff]
    %s68 = sadd.s32 0, 8
    %s69 = scalar_lea.vmem [#allocation6], %s68
    %v70 = vld [vmem:[%s69] sm:$0xff]
    %s71 = sadd.s32 0, 16
    %s72 = scalar_lea.vmem [#allocation6], %s71
    %v73 = vld [vmem:[%s72] sm:$0xff]
    %s74 = sadd.s32 0, 24
    %s75 = scalar_lea.vmem [#allocation6], %s74
    %v76 = vld [vmem:[%s75] sm:$0xff]
    %s77 = sadd.s32 0, 32
    %s78 = scalar_lea.vmem [#allocation6], %s77
    %v79 = vld [vmem:[%s78] sm:$0xff]
    %v80 = vld [vmem:[#allocation7] sm:$0xff]
    %s81 = scalar_lea.vmem [#allocation7], %s68
    %v82 = vld [vmem:[%s81] sm:$0xff]
    %s83 = scalar_lea.vmem [#allocation7], %s71
    %v84 = vld [vmem:[%s83] sm:$0xff]
    %s85 = scalar_lea.vmem [#allocation7], %s74
    %v86 = vld [vmem:[%s85] sm:$0xff]
    %87 = vst [vmem:[%s4] sm:$0xff] %v67
    %v88 = vmin.f32 %v70, %v80
    %s89 = scalar_lea.vmem %s4, %s68
    %90 = vst [vmem:[%s89] sm:$0xff] %v88
    %v91 = vmin.f32 %v73, %v82
    %s92 = scalar_lea.vmem %s4, %s71
    %93 = vst [vmem:[%s92] sm:$0xff] %v91
    %v94 = vmax.f32 %v76, %v84
    %s95 = scalar_lea.vmem %s4, %s74
    %96 = vst [vmem:[%s95] sm:$0xff] %v94
    %v97 = vmax.f32 %v79, %v86
    %s98 = scalar_lea.vmem %s4, %s77
    %99 = vst [vmem:[%s98] sm:$0xff] %v97
    %v100 = vmul.f32 %v70, %v60
    %v101 = vmul.f32 %v73, %v60
    %v102 = vmul.f32 %v76, %v60
    %v103 = vmul.f32 %v79, %v60
    %v104 = vmul.f32 %v80, %v60
    %v105 = vmul.f32 %v82, %v60
    %v106 = vmul.f32 %v84, %v60
    %v107 = vmul.f32 %v86, %v60
    %v108 = vsub.f32 %v102, %v100
    %v109 = vadd.f32 %v108, 1.0
    %v110 = vsub.f32 %v103, %v101
    %v111 = vadd.f32 %v110, 1.0
    %v112 = vsub.f32 %v106, %v104
    %v113 = vadd.f32 %v112, 1.0
    %v114 = vsub.f32 %v107, %v105
    %v115 = vadd.f32 %v114, 1.0
    %v116 = vmul.f32 %v109, %v111
    %v117 = vmul.f32 %v113, %v115
    %v118 = vmin.f32 %v102, %v106
    %v119 = vmax.f32 %v100, %v104
    %v120 = vsub.f32 %v118, %v119
    %v121 = vadd.f32 %v120, 1.0
    %v122 = vmax.f32 %v121, 0.0
    %v123 = vmin.f32 %v103, %v107
    %v124 = vmax.f32 %v101, %v105
    %v125 = vsub.f32 %v123, %v124
    %v126 = vadd.f32 %v125, 1.0
    %v127 = vmax.f32 %v126, 0.0
    %v128 = vmul.f32 %v122, %v127
    %129 = vst [vmem:[#allocation9] sm:$0xff] %v128
    %v130 = vmin.f32 %v100, %v104
    %v131 = vmin.f32 %v101, %v105
    %v132 = vmax.f32 %v102, %v106
    %v133 = vmax.f32 %v103, %v107
    %v134 = vsub.f32 %v132, %v130
    %v135 = vadd.f32 %v134, 1.0
    %v136 = vsub.f32 %v133, %v131
    %v137 = vadd.f32 %v136, 1.0
    %v138 = vrcp.pop %v109
    %v139 = vrcp.pop %v111
    %v140 = vrcp.pop %v113
    %v141 = vrcp.pop %v115
    %v142 = vrcp.pop %v135
    %v143 = vrcp.pop %v137
    %v144 = vlog2.pop %v109
    %v145 = vmul.f32 %v144, 0.6931472
    %v146 = vlog2.pop %v111
    %v147 = vmul.f32 %v146, 0.6931472
    %v148 = vlog2.pop %v113
    %v149 = vmul.f32 %v148, 0.6931472
    %v150 = vlog2.pop %v115
    %v151 = vmul.f32 %v150, 0.6931472
    %v152 = vlog2.pop %v135
    %v153 = vmul.f32 %v152, 0.6931472
    %v154 = vlog2.pop %v137
    %v155 = vmul.f32 %v154, 0.6931472
    %v156 = vmul.f32 %v109, 0.5
    %v157 = vadd.f32 %v100, %v156
    %v158 = vmul.f32 %v111, 0.5
    %v159 = vadd.f32 %v101, %v158
    %v160 = vmul.f32 %v113, 0.5
    %v161 = vadd.f32 %v104, %v160
    %v162 = vmul.f32 %v115, 0.5
    %v163 = vadd.f32 %v105, %v162
    %v164 = vmul.f32 %v135, 0.5
    %v165 = vadd.f32 %v130, %v164
    %v166 = vmul.f32 %v137, 0.5
    %v167 = vadd.f32 %v131, %v166
    %v168 = vsub.f32 %v161, %v157
    %v169 = vmul.f32 %v168, %v138
    %170 = vst [vmem:[%s5] sm:$0xff] %v169
    %v171 = vsub.f32 %v163, %v159
    %v172 = vmul.f32 %v171, %v139
    %s173 = scalar_lea.vmem %s5, %s68
    %174 = vst [vmem:[%s173] sm:$0xff] %v172
    %v175 = vsub.f32 %v149, %v145
    %s176 = scalar_lea.vmem %s5, %s71
    %177 = vst [vmem:[%s176] sm:$0xff] %v175
    %v178 = vsub.f32 %v151, %v147
    %s179 = scalar_lea.vmem %s5, %s74
    %180 = vst [vmem:[%s179] sm:$0xff] %v178
    %v181 = vsub.f32 %v157, %v161
    %v182 = vmul.f32 %v181, %v140
    %s183 = scalar_lea.vmem %s5, %s77
    %184 = vst [vmem:[%s183] sm:$0xff] %v182
    %v185 = vsub.f32 %v159, %v163
    %v186 = vmul.f32 %v185, %v141
    %s187 = sadd.s32 0, 40
    %s188 = scalar_lea.vmem %s5, %s187
    %189 = vst [vmem:[%s188] sm:$0xff] %v186
    %v190 = vsub.f32 %v165, %v157
    %v191 = vmul.f32 %v190, %v138
    %s192 = sadd.s32 0, 48
    %s193 = scalar_lea.vmem %s5, %s192
    %194 = vst [vmem:[%s193] sm:$0xff] %v191
    %v195 = vsub.f32 %v167, %v159
    %v196 = vmul.f32 %v195, %v139
    %s197 = sadd.s32 0, 56
    %s198 = scalar_lea.vmem %s5, %s197
    %199 = vst [vmem:[%s198] sm:$0xff] %v196
    %v200 = vsub.f32 %v153, %v145
    %s201 = sadd.s32 0, 64
    %s202 = scalar_lea.vmem %s5, %s201
    %203 = vst [vmem:[%s202] sm:$0xff] %v200
    %v204 = vsub.f32 %v155, %v147
    %s205 = sadd.s32 0, 72
    %s206 = scalar_lea.vmem %s5, %s205
    %207 = vst [vmem:[%s206] sm:$0xff] %v204
    %v208 = vsub.f32 %v157, %v165
    %v209 = vmul.f32 %v208, %v142
    %s210 = sadd.s32 0, 80
    %s211 = scalar_lea.vmem %s5, %s210
    %212 = vst [vmem:[%s211] sm:$0xff] %v209
    %v213 = vsub.f32 %v159, %v167
    %v214 = vmul.f32 %v213, %v143
    %s215 = sadd.s32 0, 88
    %s216 = scalar_lea.vmem %s5, %s215
    %217 = vst [vmem:[%s216] sm:$0xff] %v214
    %v218 = vsub.f32 %v161, %v165
    %v219 = vmul.f32 %v218, %v142
    %s220 = sadd.s32 0, 96
    %s221 = scalar_lea.vmem %s5, %s220
    %222 = vst [vmem:[%s221] sm:$0xff] %v219
    %v223 = vsub.f32 %v163, %v167
    %v224 = vmul.f32 %v223, %v143
    %s225 = sadd.s32 0, 104
    %s226 = scalar_lea.vmem %s5, %s225
    %227 = vst [vmem:[%s226] sm:$0xff] %v224
    %v228 = vsub.f32 %v149, %v153
    %s229 = sadd.s32 0, 112
    %s230 = scalar_lea.vmem %s5, %s229
    %231 = vst [vmem:[%s230] sm:$0xff] %v228
    %v232 = vsub.f32 %v151, %v155
    %s233 = sadd.s32 0, 120
    %s234 = scalar_lea.vmem %s5, %s233
    %235 = vst [vmem:[%s234] sm:$0xff] %v232
    %v236 = vsub.f32 %v165, %v161
    %v237 = vmul.f32 %v236, %v140
    %s238 = sadd.s32 0, 128
    %s239 = scalar_lea.vmem %s5, %s238
    %240 = vst [vmem:[%s239] sm:$0xff] %v237
    %v241 = vsub.f32 %v167, %v163
    %v242 = vmul.f32 %v241, %v141
    %s243 = sadd.s32 0, 136
    %s244 = scalar_lea.vmem %s5, %s243
    %245 = vst [vmem:[%s244] sm:$0xff] %v242
    %v246 = vmul.f32 %v100, %v62
    %s247 = sadd.s32 0, 144
    %s248 = scalar_lea.vmem %s5, %s247
    %249 = vst [vmem:[%s248] sm:$0xff] %v246
    %v250 = vmul.f32 %v101, %v64
    %s251 = sadd.s32 0, 152
    %s252 = scalar_lea.vmem %s5, %s251
    %253 = vst [vmem:[%s252] sm:$0xff] %v250
    %v254 = vmul.f32 %v102, %v62
    %s255 = sadd.s32 0, 160
    %s256 = scalar_lea.vmem %s5, %s255
    %257 = vst [vmem:[%s256] sm:$0xff] %v254
    %v258 = vmul.f32 %v103, %v64
    %s259 = sadd.s32 0, 168
    %s260 = scalar_lea.vmem %s5, %s259
    %261 = vst [vmem:[%s260] sm:$0xff] %v258
    %v262 = vmul.f32 %v116, %v66
    %s263 = sadd.s32 0, 176
    %s264 = scalar_lea.vmem %s5, %s263
    %265 = vst [vmem:[%s264] sm:$0xff] %v262
    %v266 = vmul.f32 %v104, %v62
    %s267 = sadd.s32 0, 184
    %s268 = scalar_lea.vmem %s5, %s267
    %269 = vst [vmem:[%s268] sm:$0xff] %v266
    %v270 = vmul.f32 %v105, %v64
    %s271 = sadd.s32 0, 192
    %s272 = scalar_lea.vmem %s5, %s271
    %273 = vst [vmem:[%s272] sm:$0xff] %v270
    %v274 = vmul.f32 %v106, %v62
    %s275 = sadd.s32 0, 200
    %s276 = scalar_lea.vmem %s5, %s275
    %277 = vst [vmem:[%s276] sm:$0xff] %v274
    %v278 = vmul.f32 %v107, %v64
    %s279 = sadd.s32 0, 208
    %s280 = scalar_lea.vmem %s5, %s279
    %281 = vst [vmem:[%s280] sm:$0xff] %v278
    %v282 = vmul.f32 %v117, %v66
    %s283 = sadd.s32 0, 216
    %s284 = scalar_lea.vmem %s5, %s283
    %285 = vst [vmem:[%s284] sm:$0xff] %v282
    // Predicated region
    $region26: #{_relpn_pairs_device.1} parent=1 // pred_check
      _
    $region27: #{_relpn_pairs_device.1} parent=1 // pred_check_branch
      %287 = sbr.rel (0) target = $region29
    $region28: #{_relpn_pairs_device.1} parent=1 // pred_region
      %s289 = ssub.s32 128, 128
      %290 = vsyncadd [#allocation4], %s289
      %s292 = sshll.u32 [#allocation9], 4
      %s293 = int_to_ptr.vmem [resolvable:$true] %s292
      %295 = dma.vmem_to_hbm [thread:$0]  %s293, 128, %s3, [#allocation4]
    $region29: #{_relpn_pairs_device.1} parent=1 // pred_fallthru
      _
    // Predicated region
    $region30: #{_relpn_pairs_device.1} parent=1 // pred_check
      _
    $region31: #{_relpn_pairs_device.1} parent=1 // pred_check_branch
      %297 = sbr.rel (0) target = $region33
    $region32: #{_relpn_pairs_device.1} parent=1 // pred_region
      _
    $region33: #{_relpn_pairs_device.1} parent=1 // pred_fallthru
      _
    // Predicated region
    $region34: #{_relpn_pairs_device.1} parent=1 // pred_check
      _
    $region35: #{_relpn_pairs_device.1} parent=1 // pred_check_branch
      %299 = sbr.rel (0) target = $region37
    $region36: #{_relpn_pairs_device.1} parent=1 // pred_region
      _
    $region37: #{_relpn_pairs_device.1} parent=1 // pred_fallthru
      _
    // Predicated region
    $region38: #{_relpn_pairs_device.1} parent=1 // pred_check
      _
    $region39: #{_relpn_pairs_device.1} parent=1 // pred_check_branch
      %301 = sbr.rel (0) target = $region41
    $region40: #{_relpn_pairs_device.1} parent=1 // pred_region
      %302 = dma.done [#allocation4], 128
    $region41: #{_relpn_pairs_device.1} parent=1 // pred_fallthru
      _
    // Predicated region
    $region42: #{_relpn_pairs_device.1} parent=1 // pred_check
      _
    $region43: #{_relpn_pairs_device.1} parent=1 // pred_check_branch
      %304 = sbr.rel (0) target = $region45
    $region44: #{_relpn_pairs_device.1} parent=1 // pred_region
      _
    $region45: #{_relpn_pairs_device.1} parent=1 // pred_fallthru
      _
    // Predicated region
    $region46: #{_relpn_pairs_device.1} parent=1 // pred_check
      _
    $region47: #{_relpn_pairs_device.1} parent=1 // pred_check_branch
      %306 = sbr.rel (0) target = $region49
    $region48: #{_relpn_pairs_device.1} parent=1 // pred_region
      _
    $region49: #{_relpn_pairs_device.1} parent=1 // pred_fallthru
      _
    %307 = vsyncpa [#allocation3], 1
    %308 = vsyncpa [#allocation8], 1
    %309 = vsyncpa [#allocation4], 1
    %310 = vsyncpa [#allocation5], 1

</llo_original>
